<compile_context>
chip_gen: v5e
topology: v5e:2x2
jax: 0.10.0
libtpu: 0.0.40
codegen_flags: <defaults>
</compile_context>

<pallas_src>
import functools

import jax
import jax.numpy as jnp
from jax.experimental import pallas as pl
from jax.experimental.pallas import tpu as pltpu


def rnn_attn_kernel(x_ref,      # (Tc, TB, E)  embedded inputs, one (batch-tile, time-chunk)
                    wih_ref,    # (E, H)       = W_ih^T   (zero-padded, matmul dtype)
                    bias_ref,   # (1, H)       = b_ih + b_hh (f32)
                    whh_ref,    # (H, H)       = W_hh^T   (matmul dtype)
                    watt_ref,   # (1, H)       attention vector (f32)
                    wout_ref,   # (H, O)       = W_out^T  (matmul dtype)
                    bout_ref,   # (1, O)       (f32)
                    o_ref,      # (TB, O)      output (post-sigmoid), written on last chunk
                    h_sc,       # (TB, H) f32  carried hidden state
                    m_sc,       # (TB, 1) f32  online-softmax running max
                    l_sc,       # (TB, 1) f32  online-softmax running denom
                    acc_sc):    # (TB, H) f32  online-softmax weighted accumulator
    Tc, TB, E = x_ref.shape
    H = whh_ref.shape[1]
    t_idx = pl.program_id(1)

    # ---- init carried state at the first time chunk of each batch tile ----
    @pl.when(t_idx == 0)
    def _():
        h_sc[...] = jnp.zeros_like(h_sc)
        m_sc[...] = jnp.full_like(m_sc, -1e30)
        l_sc[...] = jnp.zeros_like(l_sc)
        acc_sc[...] = jnp.zeros_like(acc_sc)

    # ---- hoisted input projection for this chunk: ONE big MXU matmul ----
    x2d = x_ref[...].reshape(Tc * TB, E)                   # TB multiple of 8 -> tile aligned
    xw = jnp.dot(x2d, wih_ref[...],
                 preferred_element_type=jnp.float32) + bias_ref[...]   # (Tc*TB, H) f32

    whh = whh_ref[...]
    watt_b = jnp.broadcast_to(watt_ref[...], (TB, H))      # hoisted; no per-step broadcast

    h = h_sc[...]
    m = m_sc[...]
    l = l_sc[...]
    acc = acc_sc[...]

    # ---- statically unrolled recurrence over this time chunk ----
    for t in range(Tc):
        pre = xw[t * TB:(t + 1) * TB, :] + jnp.dot(
            h.astype(whh.dtype), whh, preferred_element_type=jnp.float32)
        h = jnp.tanh(pre)                                  # (TB, H) f32
        # attention score computed online; (T,B,H) history never stored
        s = jnp.sum(h * watt_b, axis=-1, keepdims=True)    # (TB, 1)
        m_new = jnp.maximum(m, s)
        alpha = jnp.exp(m - m_new)
        p = jnp.exp(s - m_new)
        l = alpha * l + p
        acc = alpha * acc + p * h
        m = m_new

    # ---- carry state to the next time chunk ----
    h_sc[...] = h
    m_sc[...] = m
    l_sc[...] = l
    acc_sc[...] = acc

    # ---- finalize on the last time chunk: normalize + output head ----
    @pl.when(t_idx == pl.num_programs(1) - 1)
    def _():
        weighted = acc / l                                 # exact divide, once per tile
        logits = jnp.dot(weighted.astype(wout_ref.dtype), wout_ref[...],
                         preferred_element_type=jnp.float32) + bout_ref[...]
        o_ref[...] = jax.nn.sigmoid(logits)                # lane-dense (TB, O) store


def _round_up(n, m):
    return ((n + m - 1) // m) * m


def _largest_divisor_leq(n, cap):
    cap = max(1, min(cap, n))
    for d in range(cap, 0, -1):
        if n % d == 0:
            return d
    return 1


_HAS_BUFFERED = hasattr(pl, "Buffered")


def _resident_spec(shape):
    """BlockSpec for operands whose block index never changes: single-buffered."""
    idx = lambda b, t: (0, 0)
    if _HAS_BUFFERED:
        try:
            return pl.BlockSpec(shape, idx, pipeline_mode=pl.Buffered(1))
        except TypeError:
            pass
    return pl.BlockSpec(shape, idx)


def rnn_simple_forward(token_ids, params, *, batch_tile=64, time_chunk=32,
                       matmul_dtype=jnp.bfloat16,
                       vmem_limit_bytes=48 * 1024 * 1024):
    """token_ids: (B, T) int32. Returns (B, output_size) float32 probabilities."""
    emb = params["embedding"]                 # (V, E)
    B, T = token_ids.shape
    E = emb.shape[1]
    H = params["w_hh"].shape[0]
    O = params["w_out"].shape[0]

    # lane/sublane-friendly padded sizes
    E_pad = _round_up(E, 128)
    H_pad = _round_up(H, 128)
    O_pad = _round_up(O, 128)

    # batch tile: big enough to fill MXU rows, multiple of 8, clamped to the batch
    TB = max(8, min(_round_up(batch_tile, 8), _round_up(B, 8)))
    B_pad = _round_up(B, TB)
    # time chunk: a divisor of T so no masking of padded steps is ever needed
    Tc = _largest_divisor_leq(T, time_chunk)

    f32 = jnp.float32

    # ---- embedding gather: directly time-major, in matmul dtype (glue in plain JAX) ----
    emb_p = jnp.pad(emb.astype(matmul_dtype), ((0, 0), (0, E_pad - E)))
    tok_p = jnp.pad(token_ids, ((0, B_pad - B), (0, 0)))      # pad rows with <PAD>=0 (sliced off)
    x_tm = emb_p[tok_p.T]                                      # (T, B_pad, E_pad)

    def padw(w, r, c):
        w = w.astype(f32)
        return jnp.pad(w, ((0, r - w.shape[0]), (0, c - w.shape[1])))

    w_ih = padw(params["w_ih"].T, E_pad, H_pad).astype(matmul_dtype)     # (E_pad, H_pad)
    w_hh = padw(params["w_hh"].T, H_pad, H_pad).astype(matmul_dtype)     # (H_pad, H_pad)
    w_out = padw(params["w_out"].T, H_pad, O_pad).astype(matmul_dtype)   # (H_pad, O_pad)
    bias = jnp.pad((params["b_ih"] + params["b_hh"]).astype(f32),
                   (0, H_pad - H)).reshape(1, H_pad)                     # combined bias, f32
    w_att = jnp.pad(params["w_att"].reshape(-1).astype(f32),
                    (0, H_pad - H)).reshape(1, H_pad)
    b_out = jnp.pad(params["b_out"].astype(f32), (0, O_pad - O)).reshape(1, O_pad)

    grid = (B_pad // TB, T // Tc)
    out_padded = pl.pallas_call(
        rnn_attn_kernel,
        out_shape=jax.ShapeDtypeStruct((B_pad, O_pad), jnp.float32),
        grid_spec=pltpu.PrefetchScalarGridSpec(
            num_scalar_prefetch=0,
            grid=grid,
            in_specs=[
                pl.BlockSpec((Tc, TB, E_pad), lambda b, t: (t, b, 0)),
                _resident_spec((E_pad, H_pad)),
                _resident_spec((1, H_pad)),
                _resident_spec((H_pad, H_pad)),
                _resident_spec((1, H_pad)),
                _resident_spec((H_pad, O_pad)),
                _resident_spec((1, O_pad)),
            ],
            out_specs=pl.BlockSpec((TB, O_pad), lambda b, t: (b, 0)),
            scratch_shapes=[
                pltpu.VMEM((TB, H_pad), jnp.float32),   # h
                pltpu.VMEM((TB, 1), jnp.float32),       # m (online-softmax max)
                pltpu.VMEM((TB, 1), jnp.float32),       # l (online-softmax denom)
                pltpu.VMEM((TB, H_pad), jnp.float32),   # acc (weighted sum)
            ],
        ),
        compiler_params=pltpu.CompilerParams(
            dimension_semantics=("parallel", "arbitrary"),   # batch tiles shard across TCs
            vmem_limit_bytes=vmem_limit_bytes),
    )(x_tm, w_ih, bias, w_hh, w_att, w_out, b_out)

    return out_padded[:B, :O]


def reference_forward(token_ids, params):
    """Pure-JAX reference mirroring the PyTorch forward."""
    x = params["embedding"][token_ids]                      # (B, T, E)
    B, T, E = x.shape
    H = params["w_hh"].shape[0]
    h = jnp.zeros((B, H), jnp.float32)
    outs = []
    for t in range(T):
        h = jnp.tanh(x[:, t, :] @ params["w_ih"].T + params["b_ih"]
                     + h @ params["w_hh"].T + params["b_hh"])
        outs.append(h)
    rnn_out = jnp.stack(outs, axis=1)                       # (B, T, H)
    scores = jnp.einsum("bth,h->bt", rnn_out, params["w_att"].reshape(-1))
    attn = jax.nn.softmax(scores, axis=1)                   # (B, T)
    weighted = jnp.einsum("bt,bth->bh", attn, rnn_out)      # (B, H)
    logits = weighted @ params["w_out"].T + params["b_out"]
    return jax.nn.sigmoid(logits)


if __name__ == "__main__":
    # Small synthetic configuration consistent with the module's __init__.
    vocab_size = 16
    embedding_dimension = 32
    hidden_size = 64
    output_size = 4
    batch = 2
    seq_len = 8

    key = jax.random.PRNGKey(0)
    ks = jax.random.split(key, 8)

    params = {
        "embedding": jax.random.normal(ks[0], (vocab_size, embedding_dimension),
                                       jnp.float32) * 0.5,
        "w_ih": jax.random.normal(ks[1], (hidden_size, embedding_dimension),
                                  jnp.float32) * 0.1,
        "b_ih": jax.random.normal(ks[2], (hidden_size,), jnp.float32) * 0.1,
        "w_hh": jax.random.normal(ks[3], (hidden_size, hidden_size),
                                  jnp.float32) * 0.1,
        "b_hh": jax.random.normal(ks[4], (hidden_size,), jnp.float32) * 0.1,
        "w_att": jax.random.normal(ks[5], (1, hidden_size), jnp.float32) * 0.1,
        "w_out": jax.random.normal(ks[6], (output_size, hidden_size),
                                   jnp.float32) * 0.1,
        "b_out": jax.random.normal(ks[7], (output_size,), jnp.float32) * 0.1,
    }

    token_ids = jax.random.randint(jax.random.PRNGKey(42), (batch, seq_len),
                                   0, vocab_size, dtype=jnp.int32)

    ref = reference_forward(token_ids, params)

    # f32-operand path: tight numeric check against the reference.
    fwd_f32 = jax.jit(functools.partial(rnn_simple_forward, matmul_dtype=jnp.float32))
    out_f32 = jax.block_until_ready(fwd_f32(token_ids, params))
    assert out_f32.shape == (batch, output_size)
    assert jnp.allclose(out_f32, ref, atol=1e-3, rtol=1e-3), (out_f32, ref)

    # Default (bf16 matmul operands, f32 accumulation/state) production path: looser check.
    fwd_bf16 = jax.jit(rnn_simple_forward)
    out_bf16 = jax.block_until_ready(fwd_bf16(token_ids, params))
    assert out_bf16.shape == (batch, output_size)
    assert jnp.allclose(out_bf16, ref, atol=5e-2, rtol=5e-2), (out_bf16, ref)

    print("KERNEL_OK")
</pallas_src>

<mosaic_0001>
module attributes {stable_mosaic.version = 11 : i64} {
  func.func @rnn_attn_kernel(%arg0: i32, %arg1: i32, %arg2: memref<8x8x128xf32, #tpu.memory_space<vmem>>, %arg3: memref<128x128xf32, #tpu.memory_space<vmem>>, %arg4: memref<1x128xf32, #tpu.memory_space<vmem>>, %arg5: memref<128x128xf32, #tpu.memory_space<vmem>>, %arg6: memref<1x128xf32, #tpu.memory_space<vmem>>, %arg7: memref<128x128xf32, #tpu.memory_space<vmem>>, %arg8: memref<1x128xf32, #tpu.memory_space<vmem>>, %arg9: memref<8x128xf32, #tpu.memory_space<vmem>>, %arg10: memref<8x128xf32, #tpu.memory_space<vmem>>, %arg11: memref<8x1xf32, #tpu.memory_space<vmem>>, %arg12: memref<8x1xf32, #tpu.memory_space<vmem>>, %arg13: memref<8x128xf32, #tpu.memory_space<vmem>>) attributes {dimension_semantics = [#tpu.dimension_semantics<parallel>, #tpu.dimension_semantics<arbitrary>], iteration_bounds = array<i64: 1, 1>, scalar_prefetch = 0 : i64, scratch_operands = 4 : i64, tpu.core_type = #tpu.core_type<tc>, window_params = [{transform_indices = @transform_0, window_bounds = array<i64: 8, 8, 128>}, {pipeline_mode = #tpu.pipeline_mode<synchronous>, transform_indices = @transform_1, window_bounds = array<i64: 128, 128>}, {pipeline_mode = #tpu.pipeline_mode<synchronous>, transform_indices = @transform_2, window_bounds = array<i64: 1, 128>}, {pipeline_mode = #tpu.pipeline_mode<synchronous>, transform_indices = @transform_3, window_bounds = array<i64: 128, 128>}, {pipeline_mode = #tpu.pipeline_mode<synchronous>, transform_indices = @transform_4, window_bounds = array<i64: 1, 128>}, {pipeline_mode = #tpu.pipeline_mode<synchronous>, transform_indices = @transform_5, window_bounds = array<i64: 128, 128>}, {pipeline_mode = #tpu.pipeline_mode<synchronous>, transform_indices = @transform_6, window_bounds = array<i64: 1, 128>}, {transform_indices = @transform_7, window_bounds = array<i64: 8, 128>}]} {
    %c0_i32 = arith.constant 0 : i32
    %0 = arith.cmpi eq, %arg1, %c0_i32 : i32
    %1 = arith.extui %0 : i1 to i32
    %c0_i32_0 = arith.constant 0 : i32
    %2 = arith.cmpi ne, %1, %c0_i32_0 : i32
    scf.if %2 {
      %cst_45 = arith.constant 0.000000e+00 : f32
      %177 = vector.broadcast %cst_45 : f32 to vector<8x128xf32>
      %c0_46 = arith.constant 0 : index
      %c0_47 = arith.constant 0 : index
      %178 = vector.load %arg10[%c0_46, %c0_47] : memref<8x128xf32, #tpu.memory_space<vmem>>, vector<8x128xf32>
      tpu.vector_store %arg10[%c0_46, %c0_47], %177 {strides = array<i32>} : memref<8x128xf32, #tpu.memory_space<vmem>>, vector<8x128xf32>,
      %cst_48 = arith.constant -1.000000e+30 : f32
      %179 = vector.broadcast %cst_48 : f32 to vector<8x1xf32>
      %c0_49 = arith.constant 0 : index
      %c0_50 = arith.constant 0 : index
      %180 = vector.load %arg11[%c0_49, %c0_50] : memref<8x1xf32, #tpu.memory_space<vmem>>, vector<8x1xf32>
      tpu.vector_store %arg11[%c0_49, %c0_50], %179 {strides = array<i32>} : memref<8x1xf32, #tpu.memory_space<vmem>>, vector<8x1xf32>,
      %cst_51 = arith.constant 0.000000e+00 : f32
      %181 = vector.broadcast %cst_51 : f32 to vector<8x1xf32>
      %c0_52 = arith.constant 0 : index
      %c0_53 = arith.constant 0 : index
      %182 = vector.load %arg12[%c0_52, %c0_53] : memref<8x1xf32, #tpu.memory_space<vmem>>, vector<8x1xf32>
      tpu.vector_store %arg12[%c0_52, %c0_53], %181 {strides = array<i32>} : memref<8x1xf32, #tpu.memory_space<vmem>>, vector<8x1xf32>,
      %cst_54 = arith.constant 0.000000e+00 : f32
      %183 = vector.broadcast %cst_54 : f32 to vector<8x128xf32>
      %c0_55 = arith.constant 0 : index
      %c0_56 = arith.constant 0 : index
      %184 = vector.load %arg13[%c0_55, %c0_56] : memref<8x128xf32, #tpu.memory_space<vmem>>, vector<8x128xf32>
      tpu.vector_store %arg13[%c0_55, %c0_56], %183 {strides = array<i32>} : memref<8x128xf32, #tpu.memory_space<vmem>>, vector<8x128xf32>,
    } else {
    }
    %c0 = arith.constant 0 : index
    %c0_1 = arith.constant 0 : index
    %c0_2 = arith.constant 0 : index
    %3 = vector.load %arg2[%c0, %c0_1, %c0_2] : memref<8x8x128xf32, #tpu.memory_space<vmem>>, vector<8x8x128xf32>
    %4 = vector.shape_cast %3 : vector<8x8x128xf32> to vector<64x128xf32>
    %c0_3 = arith.constant 0 : index
    %c0_4 = arith.constant 0 : index
    %5 = vector.load %arg3[%c0_3, %c0_4] : memref<128x128xf32, #tpu.memory_space<vmem>>, vector<128x128xf32>
    %cst = arith.constant dense<0.000000e+00> : vector<64x128xf32>
    %6 = tpu.matmul %4, %5, %cst {dimension_numbers = #tpu.dot_dimension_numbers<[1], [0], [0], [1], [0, 0, 1, 1], [], []>} : vector<64x128xf32>, vector<128x128xf32>, vector<64x128xf32> -> vector<64x128xf32>
    %c0_5 = arith.constant 0 : index
    %c0_6 = arith.constant 0 : index
    %7 = vector.load %arg4[%c0_5, %c0_6] : memref<1x128xf32, #tpu.memory_space<vmem>>, vector<1x128xf32>
    %8 = vector.broadcast %7 : vector<1x128xf32> to vector<64x128xf32>
    %9 = arith.addf %6, %8 : vector<64x128xf32>
    %c0_7 = arith.constant 0 : index
    %c0_8 = arith.constant 0 : index
    %10 = vector.load %arg5[%c0_7, %c0_8] : memref<128x128xf32, #tpu.memory_space<vmem>>, vector<128x128xf32>
    %c0_9 = arith.constant 0 : index
    %c0_10 = arith.constant 0 : index
    %11 = vector.load %arg6[%c0_9, %c0_10] : memref<1x128xf32, #tpu.memory_space<vmem>>, vector<1x128xf32>
    %12 = vector.shape_cast %11 : vector<1x128xf32> to vector<1x128xf32>
    %13 = vector.broadcast %12 : vector<1x128xf32> to vector<8x128xf32>
    %c0_11 = arith.constant 0 : index
    %c0_12 = arith.constant 0 : index
    %14 = vector.load %arg10[%c0_11, %c0_12] : memref<8x128xf32, #tpu.memory_space<vmem>>, vector<8x128xf32>
    %c0_13 = arith.constant 0 : index
    %c0_14 = arith.constant 0 : index
    %15 = vector.load %arg11[%c0_13, %c0_14] : memref<8x1xf32, #tpu.memory_space<vmem>>, vector<8x1xf32>
    %c0_15 = arith.constant 0 : index
    %c0_16 = arith.constant 0 : index
    %16 = vector.load %arg12[%c0_15, %c0_16] : memref<8x1xf32, #tpu.memory_space<vmem>>, vector<8x1xf32>
    %c0_17 = arith.constant 0 : index
    %c0_18 = arith.constant 0 : index
    %17 = vector.load %arg13[%c0_17, %c0_18] : memref<8x128xf32, #tpu.memory_space<vmem>>, vector<8x128xf32>
    %18 = vector.extract_strided_slice %9 {offsets = [0, 0], sizes = [8, 128], strides = [1, 1]} : vector<64x128xf32> to vector<8x128xf32>
    %cst_19 = arith.constant dense<0.000000e+00> : vector<8x128xf32>
    %19 = tpu.matmul %14, %10, %cst_19 {dimension_numbers = #tpu.dot_dimension_numbers<[1], [0], [0], [1], [0, 0, 1, 1], [], []>} : vector<8x128xf32>, vector<128x128xf32>, vector<8x128xf32> -> vector<8x128xf32>
    %20 = arith.addf %18, %19 : vector<8x128xf32>
    %21 = math.tanh %20 : vector<8x128xf32>
    %22 = arith.mulf %21, %13 : vector<8x128xf32>
    %cst_20 = arith.constant dense<0.000000e+00> : vector<8xf32>
    %23 = vector.multi_reduction <add>, %22, %cst_20 [1] : vector<8x128xf32> to vector<8xf32>
    %24 = vector.shape_cast %23 : vector<8xf32> to vector<8x1xf32>
    %25 = arith.maximumf %15, %24 : vector<8x1xf32>
    %26 = arith.subf %15, %25 : vector<8x1xf32>
    %27 = math.exp %26 : vector<8x1xf32>
    %28 = arith.subf %24, %25 : vector<8x1xf32>
    %29 = math.exp %28 : vector<8x1xf32>
    %30 = arith.mulf %27, %16 : vector<8x1xf32>
    %31 = arith.addf %30, %29 : vector<8x1xf32>
    %32 = vector.broadcast %27 : vector<8x1xf32> to vector<8x128xf32>
    %33 = arith.mulf %32, %17 : vector<8x128xf32>
    %34 = vector.broadcast %29 : vector<8x1xf32> to vector<8x128xf32>
    %35 = arith.mulf %34, %21 : vector<8x128xf32>
    %36 = arith.addf %33, %35 : vector<8x128xf32>
    %37 = vector.extract_strided_slice %9 {offsets = [8, 0], sizes = [8, 128], strides = [1, 1]} : vector<64x128xf32> to vector<8x128xf32>
    %cst_21 = arith.constant dense<0.000000e+00> : vector<8x128xf32>
    %38 = tpu.matmul %21, %10, %cst_21 {dimension_numbers = #tpu.dot_dimension_numbers<[1], [0], [0], [1], [0, 0, 1, 1], [], []>} : vector<8x128xf32>, vector<128x128xf32>, vector<8x128xf32> -> vector<8x128xf32>
    %39 = arith.addf %37, %38 : vector<8x128xf32>
    %40 = math.tanh %39 : vector<8x128xf32>
    %41 = arith.mulf %40, %13 : vector<8x128xf32>
    %cst_22 = arith.constant dense<0.000000e+00> : vector<8xf32>
    %42 = vector.multi_reduction <add>, %41, %cst_22 [1] : vector<8x128xf32> to vector<8xf32>
    %43 = vector.shape_cast %42 : vector<8xf32> to vector<8x1xf32>
    %44 = arith.maximumf %25, %43 : vector<8x1xf32>
    %45 = arith.subf %25, %44 : vector<8x1xf32>
    %46 = math.exp %45 : vector<8x1xf32>
    %47 = arith.subf %43, %44 : vector<8x1xf32>
    %48 = math.exp %47 : vector<8x1xf32>
    %49 = arith.mulf %46, %31 : vector<8x1xf32>
    %50 = arith.addf %49, %48 : vector<8x1xf32>
    %51 = vector.broadcast %46 : vector<8x1xf32> to vector<8x128xf32>
    %52 = arith.mulf %51, %36 : vector<8x128xf32>
    %53 = vector.broadcast %48 : vector<8x1xf32> to vector<8x128xf32>
    %54 = arith.mulf %53, %40 : vector<8x128xf32>
    %55 = arith.addf %52, %54 : vector<8x128xf32>
    %56 = vector.extract_strided_slice %9 {offsets = [16, 0], sizes = [8, 128], strides = [1, 1]} : vector<64x128xf32> to vector<8x128xf32>
    %cst_23 = arith.constant dense<0.000000e+00> : vector<8x128xf32>
    %57 = tpu.matmul %40, %10, %cst_23 {dimension_numbers = #tpu.dot_dimension_numbers<[1], [0], [0], [1], [0, 0, 1, 1], [], []>} : vector<8x128xf32>, vector<128x128xf32>, vector<8x128xf32> -> vector<8x128xf32>
    %58 = arith.addf %56, %57 : vector<8x128xf32>
    %59 = math.tanh %58 : vector<8x128xf32>
    %60 = arith.mulf %59, %13 : vector<8x128xf32>
    %cst_24 = arith.constant dense<0.000000e+00> : vector<8xf32>
    %61 = vector.multi_reduction <add>, %60, %cst_24 [1] : vector<8x128xf32> to vector<8xf32>
    %62 = vector.shape_cast %61 : vector<8xf32> to vector<8x1xf32>
    %63 = arith.maximumf %44, %62 : vector<8x1xf32>
    %64 = arith.subf %44, %63 : vector<8x1xf32>
    %65 = math.exp %64 : vector<8x1xf32>
    %66 = arith.subf %62, %63 : vector<8x1xf32>
    %67 = math.exp %66 : vector<8x1xf32>
    %68 = arith.mulf %65, %50 : vector<8x1xf32>
    %69 = arith.addf %68, %67 : vector<8x1xf32>
    %70 = vector.broadcast %65 : vector<8x1xf32> to vector<8x128xf32>
    %71 = arith.mulf %70, %55 : vector<8x128xf32>
    %72 = vector.broadcast %67 : vector<8x1xf32> to vector<8x128xf32>
    %73 = arith.mulf %72, %59 : vector<8x128xf32>
    %74 = arith.addf %71, %73 : vector<8x128xf32>
    %75 = vector.extract_strided_slice %9 {offsets = [24, 0], sizes = [8, 128], strides = [1, 1]} : vector<64x128xf32> to vector<8x128xf32>
    %cst_25 = arith.constant dense<0.000000e+00> : vector<8x128xf32>
    %76 = tpu.matmul %59, %10, %cst_25 {dimension_numbers = #tpu.dot_dimension_numbers<[1], [0], [0], [1], [0, 0, 1, 1], [], []>} : vector<8x128xf32>, vector<128x128xf32>, vector<8x128xf32> -> vector<8x128xf32>
    %77 = arith.addf %75, %76 : vector<8x128xf32>
    %78 = math.tanh %77 : vector<8x128xf32>
    %79 = arith.mulf %78, %13 : vector<8x128xf32>
    %cst_26 = arith.constant dense<0.000000e+00> : vector<8xf32>
    %80 = vector.multi_reduction <add>, %79, %cst_26 [1] : vector<8x128xf32> to vector<8xf32>
    %81 = vector.shape_cast %80 : vector<8xf32> to vector<8x1xf32>
    %82 = arith.maximumf %63, %81 : vector<8x1xf32>
    %83 = arith.subf %63, %82 : vector<8x1xf32>
    %84 = math.exp %83 : vector<8x1xf32>
    %85 = arith.subf %81, %82 : vector<8x1xf32>
    %86 = math.exp %85 : vector<8x1xf32>
    %87 = arith.mulf %84, %69 : vector<8x1xf32>
    %88 = arith.addf %87, %86 : vector<8x1xf32>
    %89 = vector.broadcast %84 : vector<8x1xf32> to vector<8x128xf32>
    %90 = arith.mulf %89, %74 : vector<8x128xf32>
    %91 = vector.broadcast %86 : vector<8x1xf32> to vector<8x128xf32>
    %92 = arith.mulf %91, %78 : vector<8x128xf32>
    %93 = arith.addf %90, %92 : vector<8x128xf32>
    %94 = vector.extract_strided_slice %9 {offsets = [32, 0], sizes = [8, 128], strides = [1, 1]} : vector<64x128xf32> to vector<8x128xf32>
    %cst_27 = arith.constant dense<0.000000e+00> : vector<8x128xf32>
    %95 = tpu.matmul %78, %10, %cst_27 {dimension_numbers = #tpu.dot_dimension_numbers<[1], [0], [0], [1], [0, 0, 1, 1], [], []>} : vector<8x128xf32>, vector<128x128xf32>, vector<8x128xf32> -> vector<8x128xf32>
    %96 = arith.addf %94, %95 : vector<8x128xf32>
    %97 = math.tanh %96 : vector<8x128xf32>
    %98 = arith.mulf %97, %13 : vector<8x128xf32>
    %cst_28 = arith.constant dense<0.000000e+00> : vector<8xf32>
    %99 = vector.multi_reduction <add>, %98, %cst_28 [1] : vector<8x128xf32> to vector<8xf32>
    %100 = vector.shape_cast %99 : vector<8xf32> to vector<8x1xf32>
    %101 = arith.maximumf %82, %100 : vector<8x1xf32>
    %102 = arith.subf %82, %101 : vector<8x1xf32>
    %103 = math.exp %102 : vector<8x1xf32>
    %104 = arith.subf %100, %101 : vector<8x1xf32>
    %105 = math.exp %104 : vector<8x1xf32>
    %106 = arith.mulf %103, %88 : vector<8x1xf32>
    %107 = arith.addf %106, %105 : vector<8x1xf32>
    %108 = vector.broadcast %103 : vector<8x1xf32> to vector<8x128xf32>
    %109 = arith.mulf %108, %93 : vector<8x128xf32>
    %110 = vector.broadcast %105 : vector<8x1xf32> to vector<8x128xf32>
    %111 = arith.mulf %110, %97 : vector<8x128xf32>
    %112 = arith.addf %109, %111 : vector<8x128xf32>
    %113 = vector.extract_strided_slice %9 {offsets = [40, 0], sizes = [8, 128], strides = [1, 1]} : vector<64x128xf32> to vector<8x128xf32>
    %cst_29 = arith.constant dense<0.000000e+00> : vector<8x128xf32>
    %114 = tpu.matmul %97, %10, %cst_29 {dimension_numbers = #tpu.dot_dimension_numbers<[1], [0], [0], [1], [0, 0, 1, 1], [], []>} : vector<8x128xf32>, vector<128x128xf32>, vector<8x128xf32> -> vector<8x128xf32>
    %115 = arith.addf %113, %114 : vector<8x128xf32>
    %116 = math.tanh %115 : vector<8x128xf32>
    %117 = arith.mulf %116, %13 : vector<8x128xf32>
    %cst_30 = arith.constant dense<0.000000e+00> : vector<8xf32>
    %118 = vector.multi_reduction <add>, %117, %cst_30 [1] : vector<8x128xf32> to vector<8xf32>
    %119 = vector.shape_cast %118 : vector<8xf32> to vector<8x1xf32>
    %120 = arith.maximumf %101, %119 : vector<8x1xf32>
    %121 = arith.subf %101, %120 : vector<8x1xf32>
    %122 = math.exp %121 : vector<8x1xf32>
    %123 = arith.subf %119, %120 : vector<8x1xf32>
    %124 = math.exp %123 : vector<8x1xf32>
    %125 = arith.mulf %122, %107 : vector<8x1xf32>
    %126 = arith.addf %125, %124 : vector<8x1xf32>
    %127 = vector.broadcast %122 : vector<8x1xf32> to vector<8x128xf32>
    %128 = arith.mulf %127, %112 : vector<8x128xf32>
    %129 = vector.broadcast %124 : vector<8x1xf32> to vector<8x128xf32>
    %130 = arith.mulf %129, %116 : vector<8x128xf32>
    %131 = arith.addf %128, %130 : vector<8x128xf32>
    %132 = vector.extract_strided_slice %9 {offsets = [48, 0], sizes = [8, 128], strides = [1, 1]} : vector<64x128xf32> to vector<8x128xf32>
    %cst_31 = arith.constant dense<0.000000e+00> : vector<8x128xf32>
    %133 = tpu.matmul %116, %10, %cst_31 {dimension_numbers = #tpu.dot_dimension_numbers<[1], [0], [0], [1], [0, 0, 1, 1], [], []>} : vector<8x128xf32>, vector<128x128xf32>, vector<8x128xf32> -> vector<8x128xf32>
    %134 = arith.addf %132, %133 : vector<8x128xf32>
    %135 = math.tanh %134 : vector<8x128xf32>
    %136 = arith.mulf %135, %13 : vector<8x128xf32>
    %cst_32 = arith.constant dense<0.000000e+00> : vector<8xf32>
    %137 = vector.multi_reduction <add>, %136, %cst_32 [1] : vector<8x128xf32> to vector<8xf32>
    %138 = vector.shape_cast %137 : vector<8xf32> to vector<8x1xf32>
    %139 = arith.maximumf %120, %138 : vector<8x1xf32>
    %140 = arith.subf %120, %139 : vector<8x1xf32>
    %141 = math.exp %140 : vector<8x1xf32>
    %142 = arith.subf %138, %139 : vector<8x1xf32>
    %143 = math.exp %142 : vector<8x1xf32>
    %144 = arith.mulf %141, %126 : vector<8x1xf32>
    %145 = arith.addf %144, %143 : vector<8x1xf32>
    %146 = vector.broadcast %141 : vector<8x1xf32> to vector<8x128xf32>
    %147 = arith.mulf %146, %131 : vector<8x128xf32>
    %148 = vector.broadcast %143 : vector<8x1xf32> to vector<8x128xf32>
    %149 = arith.mulf %148, %135 : vector<8x128xf32>
    %150 = arith.addf %147, %149 : vector<8x128xf32>
    %151 = vector.extract_strided_slice %9 {offsets = [56, 0], sizes = [8, 128], strides = [1, 1]} : vector<64x128xf32> to vector<8x128xf32>
    %cst_33 = arith.constant dense<0.000000e+00> : vector<8x128xf32>
    %152 = tpu.matmul %135, %10, %cst_33 {dimension_numbers = #tpu.dot_dimension_numbers<[1], [0], [0], [1], [0, 0, 1, 1], [], []>} : vector<8x128xf32>, vector<128x128xf32>, vector<8x128xf32> -> vector<8x128xf32>
    %153 = arith.addf %151, %152 : vector<8x128xf32>
    %154 = math.tanh %153 : vector<8x128xf32>
    %155 = arith.mulf %154, %13 : vector<8x128xf32>
    %cst_34 = arith.constant dense<0.000000e+00> : vector<8xf32>
    %156 = vector.multi_reduction <add>, %155, %cst_34 [1] : vector<8x128xf32> to vector<8xf32>
    %157 = vector.shape_cast %156 : vector<8xf32> to vector<8x1xf32>
    %158 = arith.maximumf %139, %157 : vector<8x1xf32>
    %159 = arith.subf %139, %158 : vector<8x1xf32>
    %160 = math.exp %159 : vector<8x1xf32>
    %161 = arith.subf %157, %158 : vector<8x1xf32>
    %162 = math.exp %161 : vector<8x1xf32>
    %163 = arith.mulf %160, %145 : vector<8x1xf32>
    %164 = arith.addf %163, %162 : vector<8x1xf32>
    %165 = vector.broadcast %160 : vector<8x1xf32> to vector<8x128xf32>
    %166 = arith.mulf %165, %150 : vector<8x128xf32>
    %167 = vector.broadcast %162 : vector<8x1xf32> to vector<8x128xf32>
    %168 = arith.mulf %167, %154 : vector<8x128xf32>
    %169 = arith.addf %166, %168 : vector<8x128xf32>
    %c0_35 = arith.constant 0 : index
    %c0_36 = arith.constant 0 : index
    %170 = vector.load %arg10[%c0_35, %c0_36] : memref<8x128xf32, #tpu.memory_space<vmem>>, vector<8x128xf32>
    tpu.vector_store %arg10[%c0_35, %c0_36], %154 {strides = array<i32>} : memref<8x128xf32, #tpu.memory_space<vmem>>, vector<8x128xf32>,
    %c0_37 = arith.constant 0 : index
    %c0_38 = arith.constant 0 : index
    %171 = vector.load %arg11[%c0_37, %c0_38] : memref<8x1xf32, #tpu.memory_space<vmem>>, vector<8x1xf32>
    tpu.vector_store %arg11[%c0_37, %c0_38], %158 {strides = array<i32>} : memref<8x1xf32, #tpu.memory_space<vmem>>, vector<8x1xf32>,
    %c0_39 = arith.constant 0 : index
    %c0_40 = arith.constant 0 : index
    %172 = vector.load %arg12[%c0_39, %c0_40] : memref<8x1xf32, #tpu.memory_space<vmem>>, vector<8x1xf32>
    tpu.vector_store %arg12[%c0_39, %c0_40], %164 {strides = array<i32>} : memref<8x1xf32, #tpu.memory_space<vmem>>, vector<8x1xf32>,
    %c0_41 = arith.constant 0 : index
    %c0_42 = arith.constant 0 : index
    %173 = vector.load %arg13[%c0_41, %c0_42] : memref<8x128xf32, #tpu.memory_space<vmem>>, vector<8x128xf32>
    tpu.vector_store %arg13[%c0_41, %c0_42], %169 {strides = array<i32>} : memref<8x128xf32, #tpu.memory_space<vmem>>, vector<8x128xf32>,
    %c0_i32_43 = arith.constant 0 : i32
    %174 = arith.cmpi eq, %arg1, %c0_i32_43 : i32
    %175 = arith.extui %174 : i1 to i32
    %c0_i32_44 = arith.constant 0 : i32
    %176 = arith.cmpi ne, %175, %c0_i32_44 : i32
    scf.if %176 {
      %177 = vector.broadcast %164 : vector<8x1xf32> to vector<8x128xf32>
      %178 = arith.divf %169, %177 : vector<8x128xf32>
      %c0_45 = arith.constant 0 : index
      %c0_46 = arith.constant 0 : index
      %179 = vector.load %arg7[%c0_45, %c0_46] : memref<128x128xf32, #tpu.memory_space<vmem>>, vector<128x128xf32>
      %cst_47 = arith.constant dense<0.000000e+00> : vector<8x128xf32>
      %180 = tpu.matmul %178, %179, %cst_47 {dimension_numbers = #tpu.dot_dimension_numbers<[1], [0], [0], [1], [0, 0, 1, 1], [], []>} : vector<8x128xf32>, vector<128x128xf32>, vector<8x128xf32> -> vector<8x128xf32>
      %c0_48 = arith.constant 0 : index
      %c0_49 = arith.constant 0 : index
      %181 = vector.load %arg8[%c0_48, %c0_49] : memref<1x128xf32, #tpu.memory_space<vmem>>, vector<1x128xf32>
      %182 = vector.broadcast %181 : vector<1x128xf32> to vector<8x128xf32>
      %183 = arith.addf %180, %182 : vector<8x128xf32>
      %184 = arith.negf %183 : vector<8x128xf32>
      %185 = math.exp %184 : vector<8x128xf32>
      %cst_50 = arith.constant 1.000000e+00 : f32
      %186 = vector.broadcast %cst_50 : f32 to vector<8x128xf32>
      %187 = arith.addf %186, %185 : vector<8x128xf32>
      %188 = arith.divf %186, %187 : vector<8x128xf32>
      %c0_51 = arith.constant 0 : index
      %c0_52 = arith.constant 0 : index
      %189 = vector.load %arg9[%c0_51, %c0_52] : memref<8x128xf32, #tpu.memory_space<vmem>>, vector<8x128xf32>
      tpu.vector_store %arg9[%c0_51, %c0_52], %188 {strides = array<i32>} : memref<8x128xf32, #tpu.memory_space<vmem>>, vector<8x128xf32>,
    } else {
    }
    return
  }
  func.func @transform_0(%arg0: i32, %arg1: i32) -> (i32, i32, i32) {
    %c0_i32 = arith.constant 0 : i32
    %c0_i32_0 = arith.constant 0 : i32
    return %arg1, %arg0, %c0_i32 : i32, i32, i32
  }
  func.func @transform_1(%arg0: i32, %arg1: i32) -> (i32, i32) {
    %c0_i32 = arith.constant 0 : i32
    %c0_i32_0 = arith.constant 0 : i32
    %c0_i32_1 = arith.constant 0 : i32
    return %c0_i32, %c0_i32_0 : i32, i32
  }
  func.func @transform_2(%arg0: i32, %arg1: i32) -> (i32, i32) {
    %c0_i32 = arith.constant 0 : i32
    %c0_i32_0 = arith.constant 0 : i32
    %c0_i32_1 = arith.constant 0 : i32
    return %c0_i32, %c0_i32_0 : i32, i32
  }
  func.func @transform_3(%arg0: i32, %arg1: i32) -> (i32, i32) {
    %c0_i32 = arith.constant 0 : i32
    %c0_i32_0 = arith.constant 0 : i32
    %c0_i32_1 = arith.constant 0 : i32
    return %c0_i32, %c0_i32_0 : i32, i32
  }
  func.func @transform_4(%arg0: i32, %arg1: i32) -> (i32, i32) {
    %c0_i32 = arith.constant 0 : i32
    %c0_i32_0 = arith.constant 0 : i32
    %c0_i32_1 = arith.constant 0 : i32
    return %c0_i32, %c0_i32_0 : i32, i32
  }
  func.func @transform_5(%arg0: i32, %arg1: i32) -> (i32, i32) {
    %c0_i32 = arith.constant 0 : i32
    %c0_i32_0 = arith.constant 0 : i32
    %c0_i32_1 = arith.constant 0 : i32
    return %c0_i32, %c0_i32_0 : i32, i32
  }
  func.func @transform_6(%arg0: i32, %arg1: i32) -> (i32, i32) {
    %c0_i32 = arith.constant 0 : i32
    %c0_i32_0 = arith.constant 0 : i32
    %c0_i32_1 = arith.constant 0 : i32
    return %c0_i32, %c0_i32_0 : i32, i32
  }
  func.func @transform_7(%arg0: i32, %arg1: i32) -> (i32, i32) {
    %c0_i32 = arith.constant 0 : i32
    %c0_i32_0 = arith.constant 0 : i32
    return %arg0, %c0_i32 : i32, i32
  }
}

</mosaic_0001>

<llo_original>
// kernel: rnn_simple_forward.1
$region0: #{rnn_simple_forward.1}
  #allocation0 [shape = 'u32[]', space=smem, size = 0x4, offset = 0x4, fixed_abs, tag = 'smem constant byte address 0x4 - core index']
  #allocation1 [shape = 'u32[72,128]{1,0:T(1,128)}', space=vmem, size = 0x9000, scoped, tag = 'internal scratch']
  #allocation2 [shape = 'f32[8,128]{1,0:T(8,128)}', space=vmem, size = 0x1000, scoped, tag = 'scratch operand']
  #allocation3 [shape = 'f32[8,1]{1,0:T(8,128)}', space=vmem, size = 0x1000, scoped, tag = 'scratch operand']
  #allocation4 [shape = 'f32[8,1]{1,0:T(8,128)}', space=vmem, size = 0x1000, scoped, tag = 'scratch operand']
  #allocation5 [shape = 'f32[8,128]{1,0:T(8,128)}', space=vmem, size = 0x1000, scoped, tag = 'scratch operand']
  %s0 = inlined_call_operand.vmem [shape: f32[8,8,128], index: 0, kind: input, shape index: {}]
  %s1 = inlined_call_operand.vmem [shape: f32[128,128], index: 1, kind: input, shape index: {}]
  %s2 = inlined_call_operand.vmem [shape: f32[1,128], index: 2, kind: input, shape index: {}]
  %s3 = inlined_call_operand.vmem [shape: f32[128,128], index: 3, kind: input, shape index: {}]
  %s4 = inlined_call_operand.vmem [shape: f32[1,128], index: 4, kind: input, shape index: {}]
  %s5 = inlined_call_operand.vmem [shape: f32[128,128], index: 5, kind: input, shape index: {}]
  %s6 = inlined_call_operand.vmem [shape: f32[1,128], index: 6, kind: input, shape index: {}]
  %s7 = inlined_call_operand.vmem [shape: f32[8,128], index: 7, kind: output, shape index: {}]
  %s8 = sld [smem:[#allocation0]]
  $region46: #{rnn_simple_forward.1} parent=0
    _
  %s10 = ssub.s32 1, %s8
  %s11 = scalar_select 0, %s10, %s8
  // Predicated region
  $region2: #{rnn_simple_forward.1} parent=0 // pred_check
    _
  $region3: #{rnn_simple_forward.1} parent=0 // pred_check_branch
    %13 = sbr.rel (0) target = $region5
  $region4: #{rnn_simple_forward.1} parent=0 // pred_region
    _
  $region5: #{rnn_simple_forward.1} parent=0 // pred_fallthru
    _
  // Predicated region
  $region6: #{rnn_simple_forward.1} parent=0 // pred_check
    _
  $region7: #{rnn_simple_forward.1} parent=0 // pred_check_branch
    %15 = sbr.rel (0) target = $region9
  $region8: #{rnn_simple_forward.1} parent=0 // pred_region
    _
  $region9: #{rnn_simple_forward.1} parent=0 // pred_fallthru
    _
  // Predicated region
  $region10: #{rnn_simple_forward.1} parent=0 // pred_check
    _
  $region11: #{rnn_simple_forward.1} parent=0 // pred_check_branch
    %17 = sbr.rel (0) target = $region13
  $region12: #{rnn_simple_forward.1} parent=0 // pred_region
    _
  $region13: #{rnn_simple_forward.1} parent=0 // pred_fallthru
    _
  // Predicated region
  $region14: #{rnn_simple_forward.1} parent=0 // pred_check
    _
  $region15: #{rnn_simple_forward.1} parent=0 // pred_check_branch
    %19 = sbr.rel (0) target = $region17
  $region16: #{rnn_simple_forward.1} parent=0 // pred_region
    _
  $region17: #{rnn_simple_forward.1} parent=0 // pred_fallthru
    _
  // Predicated region
  $region18: #{rnn_simple_forward.1} parent=0 // pred_check
    _
  $region19: #{rnn_simple_forward.1} parent=0 // pred_check_branch
    %21 = sbr.rel (0) target = $region21
  $region20: #{rnn_simple_forward.1} parent=0 // pred_region
    _
  $region21: #{rnn_simple_forward.1} parent=0 // pred_fallthru
    _
  // Predicated region
  $region22: #{rnn_simple_forward.1} parent=0 // pred_check
    _
  $region23: #{rnn_simple_forward.1} parent=0 // pred_check_branch
    %23 = sbr.rel (0) target = $region25
  $region24: #{rnn_simple_forward.1} parent=0 // pred_region
    _
  $region25: #{rnn_simple_forward.1} parent=0 // pred_fallthru
    _
  // Predicated region
  $region26: #{rnn_simple_forward.1} parent=0 // pred_check
    _
  $region27: #{rnn_simple_forward.1} parent=0 // pred_check_branch
    %25 = sbr.rel (0) target = $region29
  $region28: #{rnn_simple_forward.1} parent=0 // pred_region
    _
  $region29: #{rnn_simple_forward.1} parent=0 // pred_fallthru
    _
  %p26 = scmp.eq.s32.totalorder 0, 0
  // Predicated region
  $region30: #{rnn_simple_forward.1} parent=0 // pred_check
    %p27 = pneg %p26
  $region31: #{rnn_simple_forward.1} parent=0 // pred_check_branch
    %29 = sbr.rel (%p27) target = $region33
  $region32: #{rnn_simple_forward.1} parent=0 // pred_region
    %30 = vst [vmem:[#allocation2] sm:$0xff] 0.0
    %vm31 = vcmask 7168
    %32 = vst.msk [vmem:[#allocation3] sm:$0xff] %vm31, -1e+30
    %33 = vst.msk [vmem:[#allocation4] sm:$0xff] %vm31, 0.0
    %34 = vst [vmem:[#allocation5] sm:$0xff] 0.0
  $region33: #{rnn_simple_forward.1} parent=0 // pred_fallthru
    _
  %v35 = vld [vmem:[%s0] sm:$0xff]
  %v36 = vld [vmem:[%s0 + $0x8] sm:$0xff]
  %v37 = vld [vmem:[%s0 + $0x10] sm:$0xff]
  %v38 = vld [vmem:[%s0 + $0x18] sm:$0xff]
  %v39 = vld [vmem:[%s0 + $0x20] sm:$0xff]
  %v40 = vld [vmem:[%s0 + $0x28] sm:$0xff]
  %v41 = vld [vmem:[%s0 + $0x30] sm:$0xff]
  %v42 = vld [vmem:[%s0 + $0x38] sm:$0xff]
  %v43 = vld [vmem:[%s1] sm:$0xff]
  %v44 = vld [vmem:[%s1 + $0x8] sm:$0xff]
  %v45 = vld [vmem:[%s1 + $0x10] sm:$0xff]
  %v46 = vld [vmem:[%s1 + $0x18] sm:$0xff]
  %v47 = vld [vmem:[%s1 + $0x20] sm:$0xff]
  %v48 = vld [vmem:[%s1 + $0x28] sm:$0xff]
  %v49 = vld [vmem:[%s1 + $0x30] sm:$0xff]
  %v50 = vld [vmem:[%s1 + $0x38] sm:$0xff]
  %v51 = vld [vmem:[%s1 + $0x40] sm:$0xff]
  %v52 = vld [vmem:[%s1 + $0x48] sm:$0xff]
  %v53 = vld [vmem:[%s1 + $0x50] sm:$0xff]
  %v54 = vld [vmem:[%s1 + $0x58] sm:$0xff]
  %v55 = vld [vmem:[%s1 + $0x60] sm:$0xff]
  %v56 = vld [vmem:[%s1 + $0x68] sm:$0xff]
  %v57 = vld [vmem:[%s1 + $0x70] sm:$0xff]
  %v58 = vld [vmem:[%s1 + $0x78] sm:$0xff]
  %v59 = vld [vmem:[%s2] sm:$0x1]
  %v61 = vperm.slane %v59, 0
  %63 = vmatpush.msra.mxu0 %v58
  %64 = vmatpush.msra.mxu0 %v57
  %65 = vmatpush.msra.mxu0 %v56
  %66 = vmatpush.msra.mxu0 %v55
  %67 = vmatpush.msra.mxu0 %v54
  %68 = vmatpush.msra.mxu0 %v53
  %69 = vmatpush.msra.mxu0 %v52
  %70 = vmatpush.msra.mxu0 %v51
  %71 = vmatpush.msra.mxu0 %v50
  %72 = vmatpush.msra.mxu0 %v49
  %73 = vmatpush.msra.mxu0 %v48
  %74 = vmatpush.msra.mxu0 %v47
  %75 = vmatpush.msra.mxu0 %v46
  %76 = vmatpush.msra.mxu0 %v45
  %77 = vmatpush.msra.mxu0 %v44
  %78 = vmatpush.msra.mxu0 %v43
  %79 = vmatmul.f32.gmra.mxu0 %v35
  %v80 = vpop.f32.mrf.mxu0
  %v81 = vadd.f32 %v61, %v80
  %82 = vmatmul.f32.gmra.mxu0 %v36
  %v83 = vpop.f32.mrf.mxu0
  %v84 = vadd.f32 %v61, %v83
  %85 = vmatmul.f32.gmra.mxu0 %v37
  %v86 = vpop.f32.mrf.mxu0
  %v87 = vadd.f32 %v61, %v86
  %88 = vmatmul.f32.gmra.mxu0 %v38
  %v89 = vpop.f32.mrf.mxu0
  %v90 = vadd.f32 %v61, %v89
  %91 = vmatmul.f32.gmra.mxu0 %v39
  %v92 = vpop.f32.mrf.mxu0
  %v93 = vadd.f32 %v61, %v92
  %94 = vmatmul.f32.gmra.mxu0 %v40
  %v95 = vpop.f32.mrf.mxu0
  %v96 = vadd.f32 %v61, %v95
  %97 = vmatmul.f32.gmra.mxu0 %v41
  %v98 = vpop.f32.mrf.mxu0
  %v99 = vadd.f32 %v61, %v98
  %100 = vmatmul.f32.gmra.mxu0 %v42
  %v101 = vpop.f32.mrf.mxu0
  %v102 = vadd.f32 %v61, %v101
  %103 = vdwg.mxu0
  %v104 = vld [vmem:[%s3] sm:$0xff]
  %v105 = vld [vmem:[%s3 + $0x8] sm:$0xff]
  %v106 = vld [vmem:[%s3 + $0x10] sm:$0xff]
  %v107 = vld [vmem:[%s3 + $0x18] sm:$0xff]
  %v108 = vld [vmem:[%s3 + $0x20] sm:$0xff]
  %v109 = vld [vmem:[%s3 + $0x28] sm:$0xff]
  %v110 = vld [vmem:[%s3 + $0x30] sm:$0xff]
  %v111 = vld [vmem:[%s3 + $0x38] sm:$0xff]
  %v112 = vld [vmem:[%s3 + $0x40] sm:$0xff]
  %v113 = vld [vmem:[%s3 + $0x48] sm:$0xff]
  %v114 = vld [vmem:[%s3 + $0x50] sm:$0xff]
  %v115 = vld [vmem:[%s3 + $0x58] sm:$0xff]
  %v116 = vld [vmem:[%s3 + $0x60] sm:$0xff]
  %v117 = vld [vmem:[%s3 + $0x68] sm:$0xff]
  %v118 = vld [vmem:[%s3 + $0x70] sm:$0xff]
  %v119 = vld [vmem:[%s3 + $0x78] sm:$0xff]
  %v120 = vld [vmem:[%s4] sm:$0x1]
  %v122 = vperm.slane %v120, 0
  %v124 = vld [vmem:[#allocation2] sm:$0xff]
  %v125 = vld [vmem:[#allocation3] sm:$0xff]
  %v126 = vld [vmem:[#allocation4] sm:$0xff]
  %v127 = vld [vmem:[#allocation5] sm:$0xff]
  %128 = vmatpush.msra.mxu0 %v119
  %129 = vmatpush.msra.mxu0 %v118
  %130 = vmatpush.msra.mxu0 %v117
  %131 = vmatpush.msra.mxu0 %v116
  %132 = vmatpush.msra.mxu0 %v115
  %133 = vmatpush.msra.mxu0 %v114
  %134 = vmatpush.msra.mxu0 %v113
  %135 = vmatpush.msra.mxu0 %v112
  %136 = vmatpush.msra.mxu0 %v111
  %137 = vmatpush.msra.mxu0 %v110
  %138 = vmatpush.msra.mxu0 %v109
  %139 = vmatpush.msra.mxu0 %v108
  %140 = vmatpush.msra.mxu0 %v107
  %141 = vmatpush.msra.mxu0 %v106
  %142 = vmatpush.msra.mxu0 %v105
  %143 = vmatpush.msra.mxu0 %v104
  %144 = vmatmul.f32.gmra.mxu0 %v124
  %v145 = vpop.f32.mrf.mxu0
  %v146 = vadd.f32 0.0, %v145
  %147 = vdwg.mxu0
  %v148 = vadd.f32 %v81, %v146
  %v149 = vtanh.pop %v148
  %v150 = vmul.f32 %v149, %v122
  %151 = vadd.xlane.f32.xlu0 %v150
  %v152 = vpop.xlane.xlu0 %151
  %v153 = vmax.f32 %v125, %v152
  %v154 = vsub.f32 %v125, %v153
  %v155 = vmul.f32 %v154, 1.442695
  %v156 = vpow.pop %v155
  %v157 = vsub.f32 %v152, %v153
  %v158 = vmul.f32 %v157, 1.442695
  %v159 = vpow.pop %v158
  %v160 = vmul.f32 %v156, %v126
  %v161 = vadd.f32 %v160, %v159
  %163 = vset.pattern.permute.xlu0 0
  %164 = vperm.xlu0 %163, %v156
  %v165 = vpop.permute.xlu0 %164
  %v167 = vmul.f32 %v165, %v127
  %169 = vset.pattern.permute.xlu0 0
  %170 = vperm.xlu0 %169, %v159
  %v171 = vpop.permute.xlu0 %170
  %v173 = vmul.f32 %v171, %v149
  %v174 = vadd.f32 %v167, %v173
  %175 = vmatpush.msra.mxu0 %v119
  %176 = vmatpush.msra.mxu0 %v118
  %177 = vmatpush.msra.mxu0 %v117
  %178 = vmatpush.msra.mxu0 %v116
  %179 = vmatpush.msra.mxu0 %v115
  %180 = vmatpush.msra.mxu0 %v114
  %181 = vmatpush.msra.mxu0 %v113
  %182 = vmatpush.msra.mxu0 %v112
  %183 = vmatpush.msra.mxu0 %v111
  %184 = vmatpush.msra.mxu0 %v110
  %185 = vmatpush.msra.mxu0 %v109
  %186 = vmatpush.msra.mxu0 %v108
  %187 = vmatpush.msra.mxu0 %v107
  %188 = vmatpush.msra.mxu0 %v106
  %189 = vmatpush.msra.mxu0 %v105
  %190 = vmatpush.msra.mxu0 %v104
  %191 = vmatmul.f32.gmra.mxu0 %v149
  %v192 = vpop.f32.mrf.mxu0
  %v193 = vadd.f32 0.0, %v192
  %194 = vdwg.mxu0
  %v195 = vadd.f32 %v84, %v193
  %v196 = vtanh.pop %v195
  %v197 = vmul.f32 %v196, %v122
  %198 = vadd.xlane.f32.xlu0 %v197
  %v199 = vpop.xlane.xlu0 %198
  %v200 = vmax.f32 %v153, %v199
  %v201 = vsub.f32 %v153, %v200
  %v202 = vmul.f32 %v201, 1.442695
  %v203 = vpow.pop %v202
  %v204 = vsub.f32 %v199, %v200
  %v205 = vmul.f32 %v204, 1.442695
  %v206 = vpow.pop %v205
  %v207 = vmul.f32 %v203, %v161
  %v208 = vadd.f32 %v207, %v206
  %210 = vset.pattern.permute.xlu0 0
  %211 = vperm.xlu0 %210, %v203
  %v212 = vpop.permute.xlu0 %211
  %v214 = vmul.f32 %v212, %v174
  %216 = vset.pattern.permute.xlu0 0
  %217 = vperm.xlu0 %216, %v206
  %v218 = vpop.permute.xlu0 %217
  %v220 = vmul.f32 %v218, %v196
  %v221 = vadd.f32 %v214, %v220
  %222 = vmatpush.msra.mxu0 %v119
  %223 = vmatpush.msra.mxu0 %v118
  %224 = vmatpush.msra.mxu0 %v117
  %225 = vmatpush.msra.mxu0 %v116
  %226 = vmatpush.msra.mxu0 %v115
  %227 = vmatpush.msra.mxu0 %v114
  %228 = vmatpush.msra.mxu0 %v113
  %229 = vmatpush.msra.mxu0 %v112
  %230 = vmatpush.msra.mxu0 %v111
  %231 = vmatpush.msra.mxu0 %v110
  %232 = vmatpush.msra.mxu0 %v109
  %233 = vmatpush.msra.mxu0 %v108
  %234 = vmatpush.msra.mxu0 %v107
  %235 = vmatpush.msra.mxu0 %v106
  %236 = vmatpush.msra.mxu0 %v105
  %237 = vmatpush.msra.mxu0 %v104
  %238 = vmatmul.f32.gmra.mxu0 %v196
  %v239 = vpop.f32.mrf.mxu0
  %v240 = vadd.f32 0.0, %v239
  %241 = vdwg.mxu0
  %v242 = vadd.f32 %v87, %v240
  %v243 = vtanh.pop %v242
  %v244 = vmul.f32 %v243, %v122
  %245 = vadd.xlane.f32.xlu0 %v244
  %v246 = vpop.xlane.xlu0 %245
  %v247 = vmax.f32 %v200, %v246
  %v248 = vsub.f32 %v200, %v247
  %v249 = vmul.f32 %v248, 1.442695
  %v250 = vpow.pop %v249
  %v251 = vsub.f32 %v246, %v247
  %v252 = vmul.f32 %v251, 1.442695
  %v253 = vpow.pop %v252
  %v254 = vmul.f32 %v250, %v208
  %v255 = vadd.f32 %v254, %v253
  %257 = vset.pattern.permute.xlu0 0
  %258 = vperm.xlu0 %257, %v250
  %v259 = vpop.permute.xlu0 %258
  %v261 = vmul.f32 %v259, %v221
  %263 = vset.pattern.permute.xlu0 0
  %264 = vperm.xlu0 %263, %v253
  %v265 = vpop.permute.xlu0 %264
  %v267 = vmul.f32 %v265, %v243
  %v268 = vadd.f32 %v261, %v267
  %269 = vmatpush.msra.mxu0 %v119
  %270 = vmatpush.msra.mxu0 %v118
  %271 = vmatpush.msra.mxu0 %v117
  %272 = vmatpush.msra.mxu0 %v116
  %273 = vmatpush.msra.mxu0 %v115
  %274 = vmatpush.msra.mxu0 %v114
  %275 = vmatpush.msra.mxu0 %v113
  %276 = vmatpush.msra.mxu0 %v112
  %277 = vmatpush.msra.mxu0 %v111
  %278 = vmatpush.msra.mxu0 %v110
  %279 = vmatpush.msra.mxu0 %v109
  %280 = vmatpush.msra.mxu0 %v108
  %281 = vmatpush.msra.mxu0 %v107
  %282 = vmatpush.msra.mxu0 %v106
  %283 = vmatpush.msra.mxu0 %v105
  %284 = vmatpush.msra.mxu0 %v104
  %285 = vmatmul.f32.gmra.mxu0 %v243
  %v286 = vpop.f32.mrf.mxu0
  %v287 = vadd.f32 0.0, %v286
  %288 = vdwg.mxu0
  %v289 = vadd.f32 %v90, %v287
  %v290 = vtanh.pop %v289
  %v291 = vmul.f32 %v290, %v122
  %292 = vadd.xlane.f32.xlu0 %v291
  %v293 = vpop.xlane.xlu0 %292
  %v294 = vmax.f32 %v247, %v293
  %v295 = vsub.f32 %v247, %v294
  %v296 = vmul.f32 %v295, 1.442695
  %v297 = vpow.pop %v296
  %v298 = vsub.f32 %v293, %v294
  %v299 = vmul.f32 %v298, 1.442695
  %v300 = vpow.pop %v299
  %v301 = vmul.f32 %v297, %v255
  %v302 = vadd.f32 %v301, %v300
  %304 = vset.pattern.permute.xlu0 0
  %305 = vperm.xlu0 %304, %v297
  %v306 = vpop.permute.xlu0 %305
  %v308 = vmul.f32 %v306, %v268
  %310 = vset.pattern.permute.xlu0 0
  %311 = vperm.xlu0 %310, %v300
  %v312 = vpop.permute.xlu0 %311
  %v314 = vmul.f32 %v312, %v290
  %v315 = vadd.f32 %v308, %v314
  %316 = vmatpush.msra.mxu0 %v119
  %317 = vmatpush.msra.mxu0 %v118
  %318 = vmatpush.msra.mxu0 %v117
  %319 = vmatpush.msra.mxu0 %v116
  %320 = vmatpush.msra.mxu0 %v115
  %321 = vmatpush.msra.mxu0 %v114
  %322 = vmatpush.msra.mxu0 %v113
  %323 = vmatpush.msra.mxu0 %v112
  %324 = vmatpush.msra.mxu0 %v111
  %325 = vmatpush.msra.mxu0 %v110
  %326 = vmatpush.msra.mxu0 %v109
  %327 = vmatpush.msra.mxu0 %v108
  %328 = vmatpush.msra.mxu0 %v107
  %329 = vmatpush.msra.mxu0 %v106
  %330 = vmatpush.msra.mxu0 %v105
  %331 = vmatpush.msra.mxu0 %v104
  %332 = vmatmul.f32.gmra.mxu0 %v290
  %v333 = vpop.f32.mrf.mxu0
  %v334 = vadd.f32 0.0, %v333
  %335 = vdwg.mxu0
  %v336 = vadd.f32 %v93, %v334
  %v337 = vtanh.pop %v336
  %v338 = vmul.f32 %v337, %v122
  %339 = vadd.xlane.f32.xlu0 %v338
  %v340 = vpop.xlane.xlu0 %339
  %v341 = vmax.f32 %v294, %v340
  %v342 = vsub.f32 %v294, %v341
  %v343 = vmul.f32 %v342, 1.442695
  %v344 = vpow.pop %v343
  %v345 = vsub.f32 %v340, %v341
  %v346 = vmul.f32 %v345, 1.442695
  %v347 = vpow.pop %v346
  %v348 = vmul.f32 %v344, %v302
  %v349 = vadd.f32 %v348, %v347
  %351 = vset.pattern.permute.xlu0 0
  %352 = vperm.xlu0 %351, %v344
  %v353 = vpop.permute.xlu0 %352
  %v355 = vmul.f32 %v353, %v315
  %357 = vset.pattern.permute.xlu0 0
  %358 = vperm.xlu0 %357, %v347
  %v359 = vpop.permute.xlu0 %358
  %v361 = vmul.f32 %v359, %v337
  %v362 = vadd.f32 %v355, %v361
  %363 = vmatpush.msra.mxu0 %v119
  %364 = vmatpush.msra.mxu0 %v118
  %365 = vmatpush.msra.mxu0 %v117
  %366 = vmatpush.msra.mxu0 %v116
  %367 = vmatpush.msra.mxu0 %v115
  %368 = vmatpush.msra.mxu0 %v114
  %369 = vmatpush.msra.mxu0 %v113
  %370 = vmatpush.msra.mxu0 %v112
  %371 = vmatpush.msra.mxu0 %v111
  %372 = vmatpush.msra.mxu0 %v110
  %373 = vmatpush.msra.mxu0 %v109
  %374 = vmatpush.msra.mxu0 %v108
  %375 = vmatpush.msra.mxu0 %v107
  %376 = vmatpush.msra.mxu0 %v106
  %377 = vmatpush.msra.mxu0 %v105
  %378 = vmatpush.msra.mxu0 %v104
  %379 = vmatmul.f32.gmra.mxu0 %v337
  %v380 = vpop.f32.mrf.mxu0
  %v381 = vadd.f32 0.0, %v380
  %382 = vdwg.mxu0
  %v383 = vadd.f32 %v96, %v381
  %v384 = vtanh.pop %v383
  %v385 = vmul.f32 %v384, %v122
  %386 = vadd.xlane.f32.xlu0 %v385
  %v387 = vpop.xlane.xlu0 %386
  %v388 = vmax.f32 %v341, %v387
  %v389 = vsub.f32 %v341, %v388
  %v390 = vmul.f32 %v389, 1.442695
  %v391 = vpow.pop %v390
  %v392 = vsub.f32 %v387, %v388
  %v393 = vmul.f32 %v392, 1.442695
  %v394 = vpow.pop %v393
  %v395 = vmul.f32 %v391, %v349
  %v396 = vadd.f32 %v395, %v394
  %398 = vset.pattern.permute.xlu0 0
  %399 = vperm.xlu0 %398, %v391
  %v400 = vpop.permute.xlu0 %399
  %v402 = vmul.f32 %v400, %v362
  %404 = vset.pattern.permute.xlu0 0
  %405 = vperm.xlu0 %404, %v394
  %v406 = vpop.permute.xlu0 %405
  %v408 = vmul.f32 %v406, %v384
  %v409 = vadd.f32 %v402, %v408
  %410 = vmatpush.msra.mxu0 %v119
  %411 = vmatpush.msra.mxu0 %v118
  %412 = vmatpush.msra.mxu0 %v117
  %413 = vmatpush.msra.mxu0 %v116
  %414 = vmatpush.msra.mxu0 %v115
  %415 = vmatpush.msra.mxu0 %v114
  %416 = vmatpush.msra.mxu0 %v113
  %417 = vmatpush.msra.mxu0 %v112
  %418 = vmatpush.msra.mxu0 %v111
  %419 = vmatpush.msra.mxu0 %v110
  %420 = vmatpush.msra.mxu0 %v109
  %421 = vmatpush.msra.mxu0 %v108
  %422 = vmatpush.msra.mxu0 %v107
  %423 = vmatpush.msra.mxu0 %v106
  %424 = vmatpush.msra.mxu0 %v105
  %425 = vmatpush.msra.mxu0 %v104
  %426 = vmatmul.f32.gmra.mxu0 %v384
  %v427 = vpop.f32.mrf.mxu0
  %v428 = vadd.f32 0.0, %v427
  %429 = vdwg.mxu0
  %v430 = vadd.f32 %v99, %v428
  %v431 = vtanh.pop %v430
  %v432 = vmul.f32 %v431, %v122
  %433 = vadd.xlane.f32.xlu0 %v432
  %v434 = vpop.xlane.xlu0 %433
  %v435 = vmax.f32 %v388, %v434
  %v436 = vsub.f32 %v388, %v435
  %v437 = vmul.f32 %v436, 1.442695
  %v438 = vpow.pop %v437
  %v439 = vsub.f32 %v434, %v435
  %v440 = vmul.f32 %v439, 1.442695
  %v441 = vpow.pop %v440
  %v442 = vmul.f32 %v438, %v396
  %v443 = vadd.f32 %v442, %v441
  %445 = vset.pattern.permute.xlu0 0
  %446 = vperm.xlu0 %445, %v438
  %v447 = vpop.permute.xlu0 %446
  %v449 = vmul.f32 %v447, %v409
  %451 = vset.pattern.permute.xlu0 0
  %452 = vperm.xlu0 %451, %v441
  %v453 = vpop.permute.xlu0 %452
  %v455 = vmul.f32 %v453, %v431
  %v456 = vadd.f32 %v449, %v455
  %457 = vmatpush.msra.mxu0 %v119
  %458 = vmatpush.msra.mxu0 %v118
  %459 = vmatpush.msra.mxu0 %v117
  %460 = vmatpush.msra.mxu0 %v116
  %461 = vmatpush.msra.mxu0 %v115
  %462 = vmatpush.msra.mxu0 %v114
  %463 = vmatpush.msra.mxu0 %v113
  %464 = vmatpush.msra.mxu0 %v112
  %465 = vmatpush.msra.mxu0 %v111
  %466 = vmatpush.msra.mxu0 %v110
  %467 = vmatpush.msra.mxu0 %v109
  %468 = vmatpush.msra.mxu0 %v108
  %469 = vmatpush.msra.mxu0 %v107
  %470 = vmatpush.msra.mxu0 %v106
  %471 = vmatpush.msra.mxu0 %v105
  %472 = vmatpush.msra.mxu0 %v104
  %473 = vmatmul.f32.gmra.mxu0 %v431
  %v474 = vpop.f32.mrf.mxu0
  %v475 = vadd.f32 0.0, %v474
  %476 = vdwg.mxu0
  %v477 = vadd.f32 %v102, %v475
  %v478 = vtanh.pop %v477
  %v479 = vmul.f32 %v478, %v122
  %480 = vadd.xlane.f32.xlu0 %v479
  %v481 = vpop.xlane.xlu0 %480
  %v482 = vmax.f32 %v435, %v481
  %v483 = vsub.f32 %v435, %v482
  %v484 = vmul.f32 %v483, 1.442695
  %v485 = vpow.pop %v484
  %v486 = vsub.f32 %v481, %v482
  %v487 = vmul.f32 %v486, 1.442695
  %v488 = vpow.pop %v487
  %v489 = vmul.f32 %v485, %v443
  %v490 = vadd.f32 %v489, %v488
  %492 = vset.pattern.permute.xlu0 0
  %493 = vperm.xlu0 %492, %v485
  %v494 = vpop.permute.xlu0 %493
  %v496 = vmul.f32 %v494, %v456
  %498 = vset.pattern.permute.xlu0 0
  %499 = vperm.xlu0 %498, %v488
  %v500 = vpop.permute.xlu0 %499
  %v502 = vmul.f32 %v500, %v478
  %v503 = vadd.f32 %v496, %v502
  %504 = vst [vmem:[#allocation2] sm:$0xff] %v478
  %vm505 = vcmask 7168
  %506 = vst.msk [vmem:[#allocation3] sm:$0xff] %vm505, %v482
  %507 = vst.msk [vmem:[#allocation4] sm:$0xff] %vm505, %v490
  %508 = vst [vmem:[#allocation5] sm:$0xff] %v503
  // Predicated region
  $region34: #{rnn_simple_forward.1} parent=0 // pred_check
    %p509 = pneg %p26
  $region35: #{rnn_simple_forward.1} parent=0 // pred_check_branch
    %511 = sbr.rel (%p509) target = $region37
  $region36: #{rnn_simple_forward.1} parent=0 // pred_region
    %513 = vset.pattern.permute.xlu0 0
    %514 = vperm.xlu0 %513, %v490
    %v515 = vpop.permute.xlu0 %514
    %v517 = vrcp.pop %v515
    %v518 = vmul.f32 %v515, %v517
    %v519 = vsub.f32 1.0, %v518
    %v520 = vmul.f32 %v517, %v519
    %v521 = vadd.f32 %v517, %v520
    %vm522 = vweird.f32 %v515
    %vm523 = vweird.f32 %v517
    %vm524 = vmor %vm522, %vm523
    %v525 = vsel %vm524, %v517, %v521
    %v526 = vand.u32 2147483647, %v515
    %vm527 = vcmp.eq.f32.partialorder %v526, 8.507059e+37
    %v528 = vand.u32 %v515, 2147483648
    %v529 = vor.u32 1.1754944e-38, %v528
    %v530 = vsel %vm527, %v529, %v525
    %v531 = vmul.f32 %v503, %v530
    %v532 = vld [vmem:[%s5] sm:$0xff]
    %v533 = vld [vmem:[%s5 + $0x8] sm:$0xff]
    %v534 = vld [vmem:[%s5 + $0x10] sm:$0xff]
    %v535 = vld [vmem:[%s5 + $0x18] sm:$0xff]
    %v536 = vld [vmem:[%s5 + $0x20] sm:$0xff]
    %v537 = vld [vmem:[%s5 + $0x28] sm:$0xff]
    %v538 = vld [vmem:[%s5 + $0x30] sm:$0xff]
    %v539 = vld [vmem:[%s5 + $0x38] sm:$0xff]
    %v540 = vld [vmem:[%s5 + $0x40] sm:$0xff]
    %v541 = vld [vmem:[%s5 + $0x48] sm:$0xff]
    %v542 = vld [vmem:[%s5 + $0x50] sm:$0xff]
    %v543 = vld [vmem:[%s5 + $0x58] sm:$0xff]
    %v544 = vld [vmem:[%s5 + $0x60] sm:$0xff]
    %v545 = vld [vmem:[%s5 + $0x68] sm:$0xff]
    %v546 = vld [vmem:[%s5 + $0x70] sm:$0xff]
    %v547 = vld [vmem:[%s5 + $0x78] sm:$0xff]
    %v548 = vld [vmem:[%s6] sm:$0x1]
    %v550 = vperm.slane %v548, 0
    %552 = vmatpush.msra.mxu0 %v547
    %553 = vmatpush.msra.mxu0 %v546
    %554 = vmatpush.msra.mxu0 %v545
    %555 = vmatpush.msra.mxu0 %v544
    %556 = vmatpush.msra.mxu0 %v543
    %557 = vmatpush.msra.mxu0 %v542
    %558 = vmatpush.msra.mxu0 %v541
    %559 = vmatpush.msra.mxu0 %v540
    %560 = vmatpush.msra.mxu0 %v539
    %561 = vmatpush.msra.mxu0 %v538
    %562 = vmatpush.msra.mxu0 %v537
    %563 = vmatpush.msra.mxu0 %v536
    %564 = vmatpush.msra.mxu0 %v535
    %565 = vmatpush.msra.mxu0 %v534
    %566 = vmatpush.msra.mxu0 %v533
    %567 = vmatpush.msra.mxu0 %v532
    %568 = vmatmul.f32.gmra.mxu0 %v531
    %v569 = vpop.f32.mrf.mxu0
    %v570 = vadd.f32 %v550, %v569
    %571 = vdwg.mxu0
    %v572 = vxor.u32 %v570, 2147483648
    %v573 = vmul.f32 %v572, 1.442695
    %v574 = vpow.pop %v573
    %v575 = vadd.f32 %v574, 1.0
    %v576 = vrcp.pop %v575
    %v577 = vmul.f32 %v575, %v576
    %v578 = vsub.f32 1.0, %v577
    %v579 = vmul.f32 %v576, %v578
    %v580 = vadd.f32 %v576, %v579
    %vm581 = vweird.f32 %v575
    %vm582 = vweird.f32 %v576
    %vm583 = vmor %vm581, %vm582
    %v584 = vsel %vm583, %v576, %v580
    %v585 = vand.u32 2147483647, %v575
    %vm586 = vcmp.eq.f32.partialorder %v585, 8.507059e+37
    %v587 = vand.u32 %v575, 2147483648
    %v588 = vor.u32 1.1754944e-38, %v587
    %v589 = vsel %vm586, %v588, %v584
    %v590 = vmul.f32 1.0, %v589
    %591 = vst [vmem:[%s7] sm:$0xff] %v590
  $region37: #{rnn_simple_forward.1} parent=0 // pred_fallthru
    _
  // Predicated region
  $region38: #{rnn_simple_forward.1} parent=0 // pred_check
    _
  $region39: #{rnn_simple_forward.1} parent=0 // pred_check_branch
    %593 = sbr.rel (0) target = $region41
  $region40: #{rnn_simple_forward.1} parent=0 // pred_region
    _
  $region41: #{rnn_simple_forward.1} parent=0 // pred_fallthru
    _
  // Predicated region
  $region42: #{rnn_simple_forward.1} parent=0 // pred_check
    _
  $region43: #{rnn_simple_forward.1} parent=0 // pred_check_branch
    %595 = sbr.rel (0) target = $region45
  $region44: #{rnn_simple_forward.1} parent=0 // pred_region
    _
  $region45: #{rnn_simple_forward.1} parent=0 // pred_fallthru
    _

</llo_original>
